<compile_context>
chip_gen: v7x
topology: tpu7x:2x2x1
jax: 0.10.0
libtpu: 0.0.40
codegen_flags: <defaults>
</compile_context>

<pallas_src>
import functools

import jax
import jax.numpy as jnp
from jax.experimental import pallas as pl
from jax.experimental.pallas import tpu as pltpu

_LANE = 128


def _round_up(x, m):
    return ((x + m - 1) // m) * m


def _round_down(x, m):
    return (x // m) * m


def _sublane_multiple(dtype):
    # Sublane packing factor: 8 for 4-byte types, 16 for bf16/f16, 32 for int8.
    return max(8, 32 // max(1, jnp.dtype(dtype).itemsize))


def _vmem_capacity_bytes():
    try:
        cap = int(pltpu.get_tpu_info().vmem_capacity_bytes)
        if cap > 0:
            return cap
    except Exception:
        pass
    return 64 << 20  # conservative default: v7x per-TensorCore VMEM


def _row_fold(H, W):
    """Smallest k dividing H with k*W >= 128 (lane-dense output rows)."""
    if W >= _LANE or H <= 1:
        return 1
    for k in range(1, H + 1):
        if H % k == 0 and k * W >= _LANE:
            return k
    return H  # even fully folded it is < 128 lanes; fold everything


def _pick_block_h(Hf, Wf, C, dtype):
    itemsize = jnp.dtype(dtype).itemsize
    sub = _sublane_multiple(dtype)
    # Physical (lane-padded) bytes per row of the input + output tiles.
    in_row = _round_up(Wf * C, _LANE) * itemsize
    out_row = _round_up(Wf, _LANE) * itemsize
    per_row = 2 * (in_row + out_row)  # x2: double-buffered pipeline
    budget = min(int(_vmem_capacity_bytes() * 0.7), 96 << 20)
    bh = max(sub, _round_down(budget // per_row, sub))
    if Hf > sub:
        # Keep >=2 grid steps so both v7x TensorCores participate.
        bh = min(bh, max(sub, _round_up(pl.cdiv(Hf, 2), sub)))
    if bh >= Hf:
        bh = Hf
    return bh


def _normalize_block_h(bh, Hf, dtype):
    sub = _sublane_multiple(dtype)
    if bh >= Hf:
        return Hf
    bh = max(sub, _round_down(bh, sub))
    return Hf if bh >= Hf else bh


def _select_strided_kernel(x_ref, o_ref, *, width, channels):
    # x_ref: (block_h, width*channels) lane-dense tile; o_ref: (block_h, width).
    if channels == 1:
        o_ref[...] = x_ref[...]
    else:
        # Stride-C lane slice: channel 0 of every pixel, already lane-dense.
        o_ref[...] = x_ref[:, pl.ds(0, width, stride=channels)]


def _select_reshape_kernel(x_ref, o_ref, *, width, channels):
    # Fallback path (only used if strided lane loads fail to lower).
    if channels == 1:
        o_ref[...] = x_ref[...]
    else:
        bh = o_ref.shape[0]
        o_ref[...] = x_ref[...].reshape(bh, width, channels)[:, :, 0]


_SELECT_KERNELS = (_select_strided_kernel, _select_reshape_kernel)
_KERNEL_IDX = {"idx": 0}  # sticky choice after first successful lowering


def _pallas_select(x2d, Wf, C, bh):
    Hf = x2d.shape[0]
    itemsize = jnp.dtype(x2d.dtype).itemsize
    in_row = _round_up(Wf * C, _LANE) * itemsize
    out_row = _round_up(Wf, _LANE) * itemsize
    working_set = 2 * bh * (in_row + out_row)
    vmem_limit = int(
        min(_vmem_capacity_bytes(), max(32 << 20, working_set + (8 << 20)))
    )

    def build(kernel_body):
        return pl.pallas_call(
            functools.partial(kernel_body, width=Wf, channels=C),
            out_shape=jax.ShapeDtypeStruct((Hf, Wf), x2d.dtype),
            grid=(pl.cdiv(Hf, bh),),
            in_specs=[
                # Last dim equals the full (dense) array width -> always a
                # legal, lane-dense block; bh tiles only the height axis.
                pl.BlockSpec((bh, Wf * C), lambda i: (i, 0)),
            ],
            out_specs=pl.BlockSpec((bh, Wf), lambda i: (i, 0)),
            compiler_params=pltpu.CompilerParams(
                dimension_semantics=("parallel",),
                vmem_limit_bytes=vmem_limit,
            ),
        )

    last_err = None
    for idx in range(_KERNEL_IDX["idx"], len(_SELECT_KERNELS)):
        try:
            out = build(_SELECT_KERNELS[idx])(x2d)
            _KERNEL_IDX["idx"] = idx
            return out
        except Exception as err:  # e.g. strided lane load not implemented
            last_err = err
    raise last_err


def add_color_channel(img, *, block_h=None):
    """JAX/Pallas equivalent of AddColorChannel.forward."""
    if img.ndim < 2:
        # The PyTorch module only prints an error; raise clearly here instead.
        raise ValueError("error, dimension lower than 2 for image")

    if img.ndim == 2:
        # No channel axis to strip; adding the leading axis is pure metadata.
        return img[None, :, :]

    if img.ndim > 3:
        # TODO(synk): PyTorch's img[:, :, 0] on >3-D inputs keeps trailing
        # dims; mirrored with plain JAX slicing (no kernel) for those ranks.
        return img[:, :, 0][None]

    H, W, C = img.shape

    # Row-fold narrow images so output rows are lane-dense (>=128 lanes).
    k = _row_fold(H, W)
    Hf, Wf = H // k, k * W

    # Free, contiguous reshape to a lane-dense 2-D view (no data movement).
    x2d = img.reshape(Hf, Wf * C)

    if block_h is None:
        bh = _pick_block_h(Hf, Wf, C, img.dtype)
    else:
        bh = _normalize_block_h(block_h, Hf, img.dtype)

    out2d = _pallas_select(x2d, Wf, C, bh)

    # Undo the row fold and add the leading color axis (both free in XLA).
    return out2d.reshape(H, W)[None, :, :]


if __name__ == "__main__":
    key = jax.random.PRNGKey(0)

    # HWC image matching the module's expected layout: H=16, W=16, C=4.
    img = jax.random.normal(key, (16, 16, 4), dtype=jnp.float32)
    out = jax.block_until_ready(add_color_channel(img))
    ref = img[:, :, 0][None, :, :]
    assert out.shape == (1, 16, 16), out.shape
    assert out.dtype == img.dtype
    assert jnp.allclose(out, ref), "mismatch vs reference (HWC path)"

    # Multi-block grid path (C=3, ragged last block) with a forced block_h.
    img2 = jax.random.normal(
        jax.random.fold_in(key, 1), (40, 136, 3), dtype=jnp.float32
    )
    out2 = jax.block_until_ready(add_color_channel(img2, block_h=16))
    ref2 = img2[:, :, 0][None, :, :]
    assert out2.shape == (1, 40, 136), out2.shape
    assert jnp.allclose(out2, ref2), "mismatch vs reference (tiled path)"

    # Auto block_h path on the same image (>=2 parallel grid steps for v7x).
    out2b = jax.block_until_ready(add_color_channel(img2))
    assert jnp.allclose(out2b, ref2), "mismatch vs reference (auto-tile path)"

    # 2-D (already channel-less) path, mirroring the PyTorch branch.
    img3 = jax.random.normal(
        jax.random.fold_in(key, 2), (16, 16), dtype=jnp.float32
    )
    out3 = jax.block_until_ready(add_color_channel(img3))
    assert out3.shape == (1, 16, 16)
    assert jnp.allclose(out3, img3[None, :, :])

    print("KERNEL_OK")
</pallas_src>

<mosaic_0001>
module attributes {stable_mosaic.version = 11 : i64} {
  func.func @_select_strided_kernel(%arg0: i32, %arg1: memref<2x512xf32, #tpu.memory_space<vmem>>, %arg2: memref<2x128xf32, #tpu.memory_space<vmem>>) attributes {dimension_semantics = [#tpu.dimension_semantics<parallel>], iteration_bounds = array<i64: 1>, scalar_prefetch = 0 : i64, scratch_operands = 0 : i64, tpu.core_type = #tpu.core_type<tc>, window_params = [{transform_indices = @transform_0, window_bounds = array<i64: 2, 512>}, {transform_indices = @transform_1, window_bounds = array<i64: 2, 128>}]} {
    %c0 = arith.constant 0 : index
    %c0_0 = arith.constant 0 : index
    %0 = tpu.strided_load %arg1[%c0, %c0_0] {strides = array<i32: 1, 4>} : memref<2x512xf32, #tpu.memory_space<vmem>>, vector<2x128xf32>
    %c0_1 = arith.constant 0 : index
    %c0_2 = arith.constant 0 : index
    %1 = vector.load %arg2[%c0_1, %c0_2] : memref<2x128xf32, #tpu.memory_space<vmem>>, vector<2x128xf32>
    tpu.vector_store %arg2[%c0_1, %c0_2], %0 {strides = array<i32>} : memref<2x128xf32, #tpu.memory_space<vmem>>, vector<2x128xf32>,
    return
  }
  func.func @transform_0(%arg0: i32) -> (i32, i32) {
    %c0_i32 = arith.constant 0 : i32
    %c0_i32_0 = arith.constant 0 : i32
    return %arg0, %c0_i32 : i32, i32
  }
  func.func @transform_1(%arg0: i32) -> (i32, i32) {
    %c0_i32 = arith.constant 0 : i32
    %c0_i32_0 = arith.constant 0 : i32
    return %arg0, %c0_i32 : i32, i32
  }
}

module attributes {stable_mosaic.version = 11 : i64} {
  func.func @_select_reshape_kernel(%arg0: i32, %arg1: memref<2x512xf32, #tpu.memory_space<vmem>>, %arg2: memref<2x128xf32, #tpu.memory_space<vmem>>) attributes {dimension_semantics = [#tpu.dimension_semantics<parallel>], iteration_bounds = array<i64: 1>, scalar_prefetch = 0 : i64, scratch_operands = 0 : i64, tpu.core_type = #tpu.core_type<tc>, window_params = [{transform_indices = @transform_0, window_bounds = array<i64: 2, 512>}, {transform_indices = @transform_1, window_bounds = array<i64: 2, 128>}]} {
    %c0 = arith.constant 0 : index
    %c0_0 = arith.constant 0 : index
    %0 = vector.load %arg1[%c0, %c0_0] : memref<2x512xf32, #tpu.memory_space<vmem>>, vector<2x512xf32>
    %1 = vector.shape_cast %0 : vector<2x512xf32> to vector<2x128x4xf32>
    %2 = vector.extract_strided_slice %1 {offsets = [0, 0, 0], sizes = [2, 128, 1], strides = [1, 1, 1]} : vector<2x128x4xf32> to vector<2x128x1xf32>
    %3 = vector.shape_cast %2 : vector<2x128x1xf32> to vector<2x128xf32>
    %c0_1 = arith.constant 0 : index
    %c0_2 = arith.constant 0 : index
    %4 = vector.load %arg2[%c0_1, %c0_2] : memref<2x128xf32, #tpu.memory_space<vmem>>, vector<2x128xf32>
    tpu.vector_store %arg2[%c0_1, %c0_2], %3 {strides = array<i32>} : memref<2x128xf32, #tpu.memory_space<vmem>>, vector<2x128xf32>,
    return
  }
  func.func @transform_0(%arg0: i32) -> (i32, i32) {
    %c0_i32 = arith.constant 0 : i32
    %c0_i32_0 = arith.constant 0 : i32
    return %arg0, %c0_i32 : i32, i32
  }
  func.func @transform_1(%arg0: i32) -> (i32, i32) {
    %c0_i32 = arith.constant 0 : i32
    %c0_i32_0 = arith.constant 0 : i32
    return %arg0, %c0_i32 : i32, i32
  }
}

</mosaic_0001>

<llo_original>
// kernel: tpu_custom_call.1
$region0: #{tpu_custom_call.1}
  #allocation0 [shape = 'u32[]', space=smem, size = 0x4, offset = 0x4, fixed_abs, tag = 'smem constant byte address 0x4 - core index']
  #allocation1 [shape = 'u32[144,128]{1,0:T(1,128)}', space=vmem, size = 0x12000, scoped, tag = 'internal scratch']
  %s0 = inlined_call_operand.hbm [shape: f32[2,512], index: 0, kind: input, shape index: {}]
  %s1 = inlined_call_operand.hbm [shape: f32[2,128], index: 1, kind: output, shape index: {}]
  %s2 = sld [smem:[#allocation0]]
  $region18: #{tpu_custom_call.1} parent=0
    _
  %s4 = ssub.s32 1, %s2
  %s5 = scalar_select 0, %s4, %s2
  $region1: #{tpu_custom_call.1} parent=0
    #allocation2 [shape = 'u8[4096]{0}', space=vmem, size = 0x1000, scoped, tag = 'input window, operand 0, single buffered']
    #allocation3 [shape = 's32[1]{0}', space=sflag, size = 0x4, scoped, tag = 'scoped memory for tpu_custom_call.1']
    #allocation4 [shape = 's32[1]{0}', space=sflag, size = 0x4, scoped, tag = 'scoped memory for tpu_custom_call.1']
    #allocation5 [shape = 'u8[1024]{0}', space=vmem, size = 0x400, scoped, tag = 'output window, operand 0, single buffered']
    %6 = vsyncpa [#allocation3], 0
    %7 = vsyncpa [#allocation4], 0
    // Predicated region
    $region2: #{tpu_custom_call.1} parent=1 // pred_check
      _
    $region3: #{tpu_custom_call.1} parent=1 // pred_check_branch
      %9 = sbr.rel (0) target = $region5
    $region4: #{tpu_custom_call.1} parent=1 // pred_region
      %s11 = ssub.s32 128, 128
      %12 = vsyncadd [#allocation3], %s11
      %s14 = sshll.u32 [#allocation2], 4
      %s15 = int_to_ptr.vmem [resolvable:$true] %s14
      %17 = dma.hbm_to_vmem [thread:$0]  %s0, 128, %s15, [#allocation3]
    $region5: #{tpu_custom_call.1} parent=1 // pred_fallthru
      _
    // Predicated region
    $region6: #{tpu_custom_call.1} parent=1 // pred_check
      _
    $region7: #{tpu_custom_call.1} parent=1 // pred_check_branch
      %19 = sbr.rel (0) target = $region9
    $region8: #{tpu_custom_call.1} parent=1 // pred_region
      %20 = dma.done [#allocation3], 128
    $region9: #{tpu_custom_call.1} parent=1 // pred_fallthru
      _
    %v21 = vld [vmem:[#allocation2] sm:$0xff]
    %v23 = vrot.slane %v21, 2
    %25 = vrot.lane.b32.xlu0 %v21, 124
    %v26 = vpop.permute.xlu0 %25
    %v27 = vrot.slane %v26, 2
    %29 = vrot.lane.b32.xlu0 %v21, 120
    %v30 = vpop.permute.xlu0 %29
    %v31 = vrot.slane %v30, 2
    %33 = vrot.lane.b32.xlu0 %v21, 116
    %v34 = vpop.permute.xlu0 %33
    %v35 = vrot.slane %v34, 2
    %37 = vrot.lane.b32.xlu0 %v21, 112
    %v38 = vpop.permute.xlu0 %37
    %v39 = vrot.slane %v38, 2
    %41 = vrot.lane.b32.xlu0 %v21, 108
    %v42 = vpop.permute.xlu0 %41
    %v43 = vrot.slane %v42, 2
    %45 = vrot.lane.b32.xlu0 %v21, 104
    %v46 = vpop.permute.xlu0 %45
    %v47 = vrot.slane %v46, 2
    %49 = vrot.lane.b32.xlu0 %v21, 100
    %v50 = vpop.permute.xlu0 %49
    %v51 = vrot.slane %v50, 2
    %53 = vrot.lane.b32.xlu0 %v21, 96
    %v54 = vpop.permute.xlu0 %53
    %v55 = vrot.slane %v54, 2
    %57 = vrot.lane.b32.xlu0 %v21, 92
    %v58 = vpop.permute.xlu0 %57
    %v59 = vrot.slane %v58, 2
    %61 = vrot.lane.b32.xlu0 %v21, 88
    %v62 = vpop.permute.xlu0 %61
    %v63 = vrot.slane %v62, 2
    %65 = vrot.lane.b32.xlu0 %v21, 84
    %v66 = vpop.permute.xlu0 %65
    %v67 = vrot.slane %v66, 2
    %69 = vrot.lane.b32.xlu0 %v21, 80
    %v70 = vpop.permute.xlu0 %69
    %v71 = vrot.slane %v70, 2
    %73 = vrot.lane.b32.xlu0 %v21, 76
    %v74 = vpop.permute.xlu0 %73
    %v75 = vrot.slane %v74, 2
    %77 = vrot.lane.b32.xlu0 %v21, 72
    %v78 = vpop.permute.xlu0 %77
    %v79 = vrot.slane %v78, 2
    %81 = vrot.lane.b32.xlu0 %v21, 68
    %v82 = vpop.permute.xlu0 %81
    %v83 = vrot.slane %v82, 2
    %85 = vrot.lane.b32.xlu0 %v21, 64
    %v86 = vpop.permute.xlu0 %85
    %v87 = vrot.slane %v86, 2
    %89 = vrot.lane.b32.xlu0 %v21, 60
    %v90 = vpop.permute.xlu0 %89
    %v91 = vrot.slane %v90, 2
    %93 = vrot.lane.b32.xlu0 %v21, 56
    %v94 = vpop.permute.xlu0 %93
    %v95 = vrot.slane %v94, 2
    %97 = vrot.lane.b32.xlu0 %v21, 52
    %v98 = vpop.permute.xlu0 %97
    %v99 = vrot.slane %v98, 2
    %101 = vrot.lane.b32.xlu0 %v21, 48
    %v102 = vpop.permute.xlu0 %101
    %v103 = vrot.slane %v102, 2
    %105 = vrot.lane.b32.xlu0 %v21, 44
    %v106 = vpop.permute.xlu0 %105
    %v107 = vrot.slane %v106, 2
    %109 = vrot.lane.b32.xlu0 %v21, 40
    %v110 = vpop.permute.xlu0 %109
    %v111 = vrot.slane %v110, 2
    %113 = vrot.lane.b32.xlu0 %v21, 36
    %v114 = vpop.permute.xlu0 %113
    %v115 = vrot.slane %v114, 2
    %117 = vrot.lane.b32.xlu0 %v21, 32
    %v118 = vpop.permute.xlu0 %117
    %v119 = vrot.slane %v118, 2
    %121 = vrot.lane.b32.xlu0 %v21, 28
    %v122 = vpop.permute.xlu0 %121
    %v123 = vrot.slane %v122, 2
    %125 = vrot.lane.b32.xlu0 %v21, 24
    %v126 = vpop.permute.xlu0 %125
    %v127 = vrot.slane %v126, 2
    %129 = vrot.lane.b32.xlu0 %v21, 20
    %v130 = vpop.permute.xlu0 %129
    %v131 = vrot.slane %v130, 2
    %133 = vrot.lane.b32.xlu0 %v21, 16
    %v134 = vpop.permute.xlu0 %133
    %v135 = vrot.slane %v134, 2
    %137 = vrot.lane.b32.xlu0 %v21, 12
    %v138 = vpop.permute.xlu0 %137
    %v139 = vrot.slane %v138, 2
    %141 = vrot.lane.b32.xlu0 %v21, 8
    %v142 = vpop.permute.xlu0 %141
    %v143 = vrot.slane %v142, 2
    %145 = vrot.lane.b32.xlu0 %v21, 4
    %v146 = vpop.permute.xlu0 %145
    %v147 = vrot.slane %v146, 2
    %v149 = vrot.slane %v21, 4
    %v151 = vrot.slane %v26, 4
    %v153 = vrot.slane %v30, 4
    %v155 = vrot.slane %v34, 4
    %v157 = vrot.slane %v38, 4
    %v159 = vrot.slane %v42, 4
    %v161 = vrot.slane %v46, 4
    %v163 = vrot.slane %v50, 4
    %v165 = vrot.slane %v54, 4
    %v167 = vrot.slane %v58, 4
    %v169 = vrot.slane %v62, 4
    %v171 = vrot.slane %v66, 4
    %v173 = vrot.slane %v70, 4
    %v175 = vrot.slane %v74, 4
    %v177 = vrot.slane %v78, 4
    %v179 = vrot.slane %v82, 4
    %v181 = vrot.slane %v86, 4
    %v183 = vrot.slane %v90, 4
    %v185 = vrot.slane %v94, 4
    %v187 = vrot.slane %v98, 4
    %v189 = vrot.slane %v102, 4
    %v191 = vrot.slane %v106, 4
    %v193 = vrot.slane %v110, 4
    %v195 = vrot.slane %v114, 4
    %v197 = vrot.slane %v118, 4
    %v199 = vrot.slane %v122, 4
    %v201 = vrot.slane %v126, 4
    %v203 = vrot.slane %v130, 4
    %v205 = vrot.slane %v134, 4
    %v207 = vrot.slane %v138, 4
    %v209 = vrot.slane %v142, 4
    %v211 = vrot.slane %v146, 4
    %v213 = vrot.slane %v21, 6
    %v215 = vrot.slane %v26, 6
    %v217 = vrot.slane %v30, 6
    %v219 = vrot.slane %v34, 6
    %v221 = vrot.slane %v38, 6
    %v223 = vrot.slane %v42, 6
    %v225 = vrot.slane %v46, 6
    %v227 = vrot.slane %v50, 6
    %v229 = vrot.slane %v54, 6
    %v231 = vrot.slane %v58, 6
    %v233 = vrot.slane %v62, 6
    %v235 = vrot.slane %v66, 6
    %v237 = vrot.slane %v70, 6
    %v239 = vrot.slane %v74, 6
    %v241 = vrot.slane %v78, 6
    %v243 = vrot.slane %v82, 6
    %v245 = vrot.slane %v86, 6
    %v247 = vrot.slane %v90, 6
    %v249 = vrot.slane %v94, 6
    %v251 = vrot.slane %v98, 6
    %v253 = vrot.slane %v102, 6
    %v255 = vrot.slane %v106, 6
    %v257 = vrot.slane %v110, 6
    %v259 = vrot.slane %v114, 6
    %v261 = vrot.slane %v118, 6
    %v263 = vrot.slane %v122, 6
    %v265 = vrot.slane %v126, 6
    %v267 = vrot.slane %v130, 6
    %v269 = vrot.slane %v134, 6
    %v271 = vrot.slane %v138, 6
    %v273 = vrot.slane %v142, 6
    %v275 = vrot.slane %v146, 6
    %v308 = vcombine.low %v21, %v26
    %v310 = vunpack.c.l.s4 1934713408
    %v311 = vunpack.c.0.s8 %v310
    %v312 = vlaneseq
    %v313 = vshrl.u32 %v312, 7
    %v314 = vsub.s32 %v311, %v313
    %v315 = vrot.slane %v308, %v314
    %v316 = vcombine.high %v315, 0.0
    %v317 = vcombine.low %v30, %v34
    %v319 = vunpack.c.l.s4 1934713408
    %v320 = vunpack.c.0.s8 %v319
    %v321 = vlaneseq
    %v322 = vshrl.u32 %v321, 7
    %v323 = vsub.s32 %v320, %v322
    %v324 = vrot.slane %v317, %v323
    %v325 = vcombine.high %v324, 0.0
    %v326 = vcombine.low %v38, %v42
    %v328 = vunpack.c.l.s4 1934713408
    %v329 = vunpack.c.0.s8 %v328
    %v330 = vlaneseq
    %v331 = vshrl.u32 %v330, 7
    %v332 = vsub.s32 %v329, %v331
    %v333 = vrot.slane %v326, %v332
    %v334 = vcombine.high %v333, 0.0
    %v335 = vcombine.low %v46, %v50
    %v337 = vunpack.c.l.s4 1934713408
    %v338 = vunpack.c.0.s8 %v337
    %v339 = vlaneseq
    %v340 = vshrl.u32 %v339, 7
    %v341 = vsub.s32 %v338, %v340
    %v342 = vrot.slane %v335, %v341
    %v343 = vcombine.high %v342, 0.0
    %v344 = vcombine.low %v54, %v58
    %v346 = vunpack.c.l.s4 1934713408
    %v347 = vunpack.c.0.s8 %v346
    %v348 = vlaneseq
    %v349 = vshrl.u32 %v348, 7
    %v350 = vsub.s32 %v347, %v349
    %v351 = vrot.slane %v344, %v350
    %v352 = vcombine.high %v351, 0.0
    %v353 = vcombine.low %v62, %v66
    %v355 = vunpack.c.l.s4 1934713408
    %v356 = vunpack.c.0.s8 %v355
    %v357 = vlaneseq
    %v358 = vshrl.u32 %v357, 7
    %v359 = vsub.s32 %v356, %v358
    %v360 = vrot.slane %v353, %v359
    %v361 = vcombine.high %v360, 0.0
    %v362 = vcombine.low %v70, %v74
    %v364 = vunpack.c.l.s4 1934713408
    %v365 = vunpack.c.0.s8 %v364
    %v366 = vlaneseq
    %v367 = vshrl.u32 %v366, 7
    %v368 = vsub.s32 %v365, %v367
    %v369 = vrot.slane %v362, %v368
    %v370 = vcombine.high %v369, 0.0
    %v371 = vcombine.low %v78, %v82
    %v373 = vunpack.c.l.s4 1934713408
    %v374 = vunpack.c.0.s8 %v373
    %v375 = vlaneseq
    %v376 = vshrl.u32 %v375, 7
    %v377 = vsub.s32 %v374, %v376
    %v378 = vrot.slane %v371, %v377
    %v379 = vcombine.high %v378, 0.0
    %v380 = vcombine.low %v86, %v90
    %v382 = vunpack.c.l.s4 1934713408
    %v383 = vunpack.c.0.s8 %v382
    %v384 = vlaneseq
    %v385 = vshrl.u32 %v384, 7
    %v386 = vsub.s32 %v383, %v385
    %v387 = vrot.slane %v380, %v386
    %v388 = vcombine.high %v387, 0.0
    %v389 = vcombine.low %v94, %v98
    %v391 = vunpack.c.l.s4 1934713408
    %v392 = vunpack.c.0.s8 %v391
    %v393 = vlaneseq
    %v394 = vshrl.u32 %v393, 7
    %v395 = vsub.s32 %v392, %v394
    %v396 = vrot.slane %v389, %v395
    %v397 = vcombine.high %v396, 0.0
    %v398 = vcombine.low %v102, %v106
    %v400 = vunpack.c.l.s4 1934713408
    %v401 = vunpack.c.0.s8 %v400
    %v402 = vlaneseq
    %v403 = vshrl.u32 %v402, 7
    %v404 = vsub.s32 %v401, %v403
    %v405 = vrot.slane %v398, %v404
    %v406 = vcombine.high %v405, 0.0
    %v407 = vcombine.low %v110, %v114
    %v409 = vunpack.c.l.s4 1934713408
    %v410 = vunpack.c.0.s8 %v409
    %v411 = vlaneseq
    %v412 = vshrl.u32 %v411, 7
    %v413 = vsub.s32 %v410, %v412
    %v414 = vrot.slane %v407, %v413
    %v415 = vcombine.high %v414, 0.0
    %v416 = vcombine.low %v118, %v122
    %v418 = vunpack.c.l.s4 1934713408
    %v419 = vunpack.c.0.s8 %v418
    %v420 = vlaneseq
    %v421 = vshrl.u32 %v420, 7
    %v422 = vsub.s32 %v419, %v421
    %v423 = vrot.slane %v416, %v422
    %v424 = vcombine.high %v423, 0.0
    %v425 = vcombine.low %v126, %v130
    %v427 = vunpack.c.l.s4 1934713408
    %v428 = vunpack.c.0.s8 %v427
    %v429 = vlaneseq
    %v430 = vshrl.u32 %v429, 7
    %v431 = vsub.s32 %v428, %v430
    %v432 = vrot.slane %v425, %v431
    %v433 = vcombine.high %v432, 0.0
    %v434 = vcombine.low %v134, %v138
    %v436 = vunpack.c.l.s4 1934713408
    %v437 = vunpack.c.0.s8 %v436
    %v438 = vlaneseq
    %v439 = vshrl.u32 %v438, 7
    %v440 = vsub.s32 %v437, %v439
    %v441 = vrot.slane %v434, %v440
    %v442 = vcombine.high %v441, 0.0
    %v443 = vcombine.low %v142, %v146
    %v445 = vunpack.c.l.s4 1934713408
    %v446 = vunpack.c.0.s8 %v445
    %v447 = vlaneseq
    %v448 = vshrl.u32 %v447, 7
    %v449 = vsub.s32 %v446, %v448
    %v450 = vrot.slane %v443, %v449
    %v451 = vcombine.high %v450, 0.0
    %v452 = vcombine.low %v23, %v27
    %v454 = vunpack.c.l.s4 1934713408
    %v455 = vunpack.c.0.s8 %v454
    %v456 = vlaneseq
    %v457 = vshrl.u32 %v456, 7
    %v458 = vsub.s32 %v455, %v457
    %v459 = vrot.slane %v452, %v458
    %v460 = vcombine.high %v459, 0.0
    %v461 = vcombine.low %v31, %v35
    %v463 = vunpack.c.l.s4 1934713408
    %v464 = vunpack.c.0.s8 %v463
    %v465 = vlaneseq
    %v466 = vshrl.u32 %v465, 7
    %v467 = vsub.s32 %v464, %v466
    %v468 = vrot.slane %v461, %v467
    %v469 = vcombine.high %v468, 0.0
    %v470 = vcombine.low %v39, %v43
    %v472 = vunpack.c.l.s4 1934713408
    %v473 = vunpack.c.0.s8 %v472
    %v474 = vlaneseq
    %v475 = vshrl.u32 %v474, 7
    %v476 = vsub.s32 %v473, %v475
    %v477 = vrot.slane %v470, %v476
    %v478 = vcombine.high %v477, 0.0
    %v479 = vcombine.low %v47, %v51
    %v481 = vunpack.c.l.s4 1934713408
    %v482 = vunpack.c.0.s8 %v481
    %v483 = vlaneseq
    %v484 = vshrl.u32 %v483, 7
    %v485 = vsub.s32 %v482, %v484
    %v486 = vrot.slane %v479, %v485
    %v487 = vcombine.high %v486, 0.0
    %v488 = vcombine.low %v55, %v59
    %v490 = vunpack.c.l.s4 1934713408
    %v491 = vunpack.c.0.s8 %v490
    %v492 = vlaneseq
    %v493 = vshrl.u32 %v492, 7
    %v494 = vsub.s32 %v491, %v493
    %v495 = vrot.slane %v488, %v494
    %v496 = vcombine.high %v495, 0.0
    %v497 = vcombine.low %v63, %v67
    %v499 = vunpack.c.l.s4 1934713408
    %v500 = vunpack.c.0.s8 %v499
    %v501 = vlaneseq
    %v502 = vshrl.u32 %v501, 7
    %v503 = vsub.s32 %v500, %v502
    %v504 = vrot.slane %v497, %v503
    %v505 = vcombine.high %v504, 0.0
    %v506 = vcombine.low %v71, %v75
    %v508 = vunpack.c.l.s4 1934713408
    %v509 = vunpack.c.0.s8 %v508
    %v510 = vlaneseq
    %v511 = vshrl.u32 %v510, 7
    %v512 = vsub.s32 %v509, %v511
    %v513 = vrot.slane %v506, %v512
    %v514 = vcombine.high %v513, 0.0
    %v515 = vcombine.low %v79, %v83
    %v517 = vunpack.c.l.s4 1934713408
    %v518 = vunpack.c.0.s8 %v517
    %v519 = vlaneseq
    %v520 = vshrl.u32 %v519, 7
    %v521 = vsub.s32 %v518, %v520
    %v522 = vrot.slane %v515, %v521
    %v523 = vcombine.high %v522, 0.0
    %v524 = vcombine.low %v87, %v91
    %v526 = vunpack.c.l.s4 1934713408
    %v527 = vunpack.c.0.s8 %v526
    %v528 = vlaneseq
    %v529 = vshrl.u32 %v528, 7
    %v530 = vsub.s32 %v527, %v529
    %v531 = vrot.slane %v524, %v530
    %v532 = vcombine.high %v531, 0.0
    %v533 = vcombine.low %v95, %v99
    %v535 = vunpack.c.l.s4 1934713408
    %v536 = vunpack.c.0.s8 %v535
    %v537 = vlaneseq
    %v538 = vshrl.u32 %v537, 7
    %v539 = vsub.s32 %v536, %v538
    %v540 = vrot.slane %v533, %v539
    %v541 = vcombine.high %v540, 0.0
    %v542 = vcombine.low %v103, %v107
    %v544 = vunpack.c.l.s4 1934713408
    %v545 = vunpack.c.0.s8 %v544
    %v546 = vlaneseq
    %v547 = vshrl.u32 %v546, 7
    %v548 = vsub.s32 %v545, %v547
    %v549 = vrot.slane %v542, %v548
    %v550 = vcombine.high %v549, 0.0
    %v551 = vcombine.low %v111, %v115
    %v553 = vunpack.c.l.s4 1934713408
    %v554 = vunpack.c.0.s8 %v553
    %v555 = vlaneseq
    %v556 = vshrl.u32 %v555, 7
    %v557 = vsub.s32 %v554, %v556
    %v558 = vrot.slane %v551, %v557
    %v559 = vcombine.high %v558, 0.0
    %v560 = vcombine.low %v119, %v123
    %v562 = vunpack.c.l.s4 1934713408
    %v563 = vunpack.c.0.s8 %v562
    %v564 = vlaneseq
    %v565 = vshrl.u32 %v564, 7
    %v566 = vsub.s32 %v563, %v565
    %v567 = vrot.slane %v560, %v566
    %v568 = vcombine.high %v567, 0.0
    %v569 = vcombine.low %v127, %v131
    %v571 = vunpack.c.l.s4 1934713408
    %v572 = vunpack.c.0.s8 %v571
    %v573 = vlaneseq
    %v574 = vshrl.u32 %v573, 7
    %v575 = vsub.s32 %v572, %v574
    %v576 = vrot.slane %v569, %v575
    %v577 = vcombine.high %v576, 0.0
    %v578 = vcombine.low %v135, %v139
    %v580 = vunpack.c.l.s4 1934713408
    %v581 = vunpack.c.0.s8 %v580
    %v582 = vlaneseq
    %v583 = vshrl.u32 %v582, 7
    %v584 = vsub.s32 %v581, %v583
    %v585 = vrot.slane %v578, %v584
    %v586 = vcombine.high %v585, 0.0
    %v587 = vcombine.low %v143, %v147
    %v589 = vunpack.c.l.s4 1934713408
    %v590 = vunpack.c.0.s8 %v589
    %v591 = vlaneseq
    %v592 = vshrl.u32 %v591, 7
    %v593 = vsub.s32 %v590, %v592
    %v594 = vrot.slane %v587, %v593
    %v595 = vcombine.high %v594, 0.0
    %v596 = vcombine.low %v149, %v151
    %v598 = vunpack.c.l.s4 1934713408
    %v599 = vunpack.c.0.s8 %v598
    %v600 = vlaneseq
    %v601 = vshrl.u32 %v600, 7
    %v602 = vsub.s32 %v599, %v601
    %v603 = vrot.slane %v596, %v602
    %v604 = vcombine.high %v603, 0.0
    %v605 = vcombine.low %v153, %v155
    %v607 = vunpack.c.l.s4 1934713408
    %v608 = vunpack.c.0.s8 %v607
    %v609 = vlaneseq
    %v610 = vshrl.u32 %v609, 7
    %v611 = vsub.s32 %v608, %v610
    %v612 = vrot.slane %v605, %v611
    %v613 = vcombine.high %v612, 0.0
    %v614 = vcombine.low %v157, %v159
    %v616 = vunpack.c.l.s4 1934713408
    %v617 = vunpack.c.0.s8 %v616
    %v618 = vlaneseq
    %v619 = vshrl.u32 %v618, 7
    %v620 = vsub.s32 %v617, %v619
    %v621 = vrot.slane %v614, %v620
    %v622 = vcombine.high %v621, 0.0
    %v623 = vcombine.low %v161, %v163
    %v625 = vunpack.c.l.s4 1934713408
    %v626 = vunpack.c.0.s8 %v625
    %v627 = vlaneseq
    %v628 = vshrl.u32 %v627, 7
    %v629 = vsub.s32 %v626, %v628
    %v630 = vrot.slane %v623, %v629
    %v631 = vcombine.high %v630, 0.0
    %v632 = vcombine.low %v165, %v167
    %v634 = vunpack.c.l.s4 1934713408
    %v635 = vunpack.c.0.s8 %v634
    %v636 = vlaneseq
    %v637 = vshrl.u32 %v636, 7
    %v638 = vsub.s32 %v635, %v637
    %v639 = vrot.slane %v632, %v638
    %v640 = vcombine.high %v639, 0.0
    %v641 = vcombine.low %v169, %v171
    %v643 = vunpack.c.l.s4 1934713408
    %v644 = vunpack.c.0.s8 %v643
    %v645 = vlaneseq
    %v646 = vshrl.u32 %v645, 7
    %v647 = vsub.s32 %v644, %v646
    %v648 = vrot.slane %v641, %v647
    %v649 = vcombine.high %v648, 0.0
    %v650 = vcombine.low %v173, %v175
    %v652 = vunpack.c.l.s4 1934713408
    %v653 = vunpack.c.0.s8 %v652
    %v654 = vlaneseq
    %v655 = vshrl.u32 %v654, 7
    %v656 = vsub.s32 %v653, %v655
    %v657 = vrot.slane %v650, %v656
    %v658 = vcombine.high %v657, 0.0
    %v659 = vcombine.low %v177, %v179
    %v661 = vunpack.c.l.s4 1934713408
    %v662 = vunpack.c.0.s8 %v661
    %v663 = vlaneseq
    %v664 = vshrl.u32 %v663, 7
    %v665 = vsub.s32 %v662, %v664
    %v666 = vrot.slane %v659, %v665
    %v667 = vcombine.high %v666, 0.0
    %v668 = vcombine.low %v181, %v183
    %v670 = vunpack.c.l.s4 1934713408
    %v671 = vunpack.c.0.s8 %v670
    %v672 = vlaneseq
    %v673 = vshrl.u32 %v672, 7
    %v674 = vsub.s32 %v671, %v673
    %v675 = vrot.slane %v668, %v674
    %v676 = vcombine.high %v675, 0.0
    %v677 = vcombine.low %v185, %v187
    %v679 = vunpack.c.l.s4 1934713408
    %v680 = vunpack.c.0.s8 %v679
    %v681 = vlaneseq
    %v682 = vshrl.u32 %v681, 7
    %v683 = vsub.s32 %v680, %v682
    %v684 = vrot.slane %v677, %v683
    %v685 = vcombine.high %v684, 0.0
    %v686 = vcombine.low %v189, %v191
    %v688 = vunpack.c.l.s4 1934713408
    %v689 = vunpack.c.0.s8 %v688
    %v690 = vlaneseq
    %v691 = vshrl.u32 %v690, 7
    %v692 = vsub.s32 %v689, %v691
    %v693 = vrot.slane %v686, %v692
    %v694 = vcombine.high %v693, 0.0
    %v695 = vcombine.low %v193, %v195
    %v697 = vunpack.c.l.s4 1934713408
    %v698 = vunpack.c.0.s8 %v697
    %v699 = vlaneseq
    %v700 = vshrl.u32 %v699, 7
    %v701 = vsub.s32 %v698, %v700
    %v702 = vrot.slane %v695, %v701
    %v703 = vcombine.high %v702, 0.0
    %v704 = vcombine.low %v197, %v199
    %v706 = vunpack.c.l.s4 1934713408
    %v707 = vunpack.c.0.s8 %v706
    %v708 = vlaneseq
    %v709 = vshrl.u32 %v708, 7
    %v710 = vsub.s32 %v707, %v709
    %v711 = vrot.slane %v704, %v710
    %v712 = vcombine.high %v711, 0.0
    %v713 = vcombine.low %v201, %v203
    %v715 = vunpack.c.l.s4 1934713408
    %v716 = vunpack.c.0.s8 %v715
    %v717 = vlaneseq
    %v718 = vshrl.u32 %v717, 7
    %v719 = vsub.s32 %v716, %v718
    %v720 = vrot.slane %v713, %v719
    %v721 = vcombine.high %v720, 0.0
    %v722 = vcombine.low %v205, %v207
    %v724 = vunpack.c.l.s4 1934713408
    %v725 = vunpack.c.0.s8 %v724
    %v726 = vlaneseq
    %v727 = vshrl.u32 %v726, 7
    %v728 = vsub.s32 %v725, %v727
    %v729 = vrot.slane %v722, %v728
    %v730 = vcombine.high %v729, 0.0
    %v731 = vcombine.low %v209, %v211
    %v733 = vunpack.c.l.s4 1934713408
    %v734 = vunpack.c.0.s8 %v733
    %v735 = vlaneseq
    %v736 = vshrl.u32 %v735, 7
    %v737 = vsub.s32 %v734, %v736
    %v738 = vrot.slane %v731, %v737
    %v739 = vcombine.high %v738, 0.0
    %v740 = vcombine.low %v213, %v215
    %v742 = vunpack.c.l.s4 1934713408
    %v743 = vunpack.c.0.s8 %v742
    %v744 = vlaneseq
    %v745 = vshrl.u32 %v744, 7
    %v746 = vsub.s32 %v743, %v745
    %v747 = vrot.slane %v740, %v746
    %v748 = vcombine.high %v747, 0.0
    %v749 = vcombine.low %v217, %v219
    %v751 = vunpack.c.l.s4 1934713408
    %v752 = vunpack.c.0.s8 %v751
    %v753 = vlaneseq
    %v754 = vshrl.u32 %v753, 7
    %v755 = vsub.s32 %v752, %v754
    %v756 = vrot.slane %v749, %v755
    %v757 = vcombine.high %v756, 0.0
    %v758 = vcombine.low %v221, %v223
    %v760 = vunpack.c.l.s4 1934713408
    %v761 = vunpack.c.0.s8 %v760
    %v762 = vlaneseq
    %v763 = vshrl.u32 %v762, 7
    %v764 = vsub.s32 %v761, %v763
    %v765 = vrot.slane %v758, %v764
    %v766 = vcombine.high %v765, 0.0
    %v767 = vcombine.low %v225, %v227
    %v769 = vunpack.c.l.s4 1934713408
    %v770 = vunpack.c.0.s8 %v769
    %v771 = vlaneseq
    %v772 = vshrl.u32 %v771, 7
    %v773 = vsub.s32 %v770, %v772
    %v774 = vrot.slane %v767, %v773
    %v775 = vcombine.high %v774, 0.0
    %v776 = vcombine.low %v229, %v231
    %v778 = vunpack.c.l.s4 1934713408
    %v779 = vunpack.c.0.s8 %v778
    %v780 = vlaneseq
    %v781 = vshrl.u32 %v780, 7
    %v782 = vsub.s32 %v779, %v781
    %v783 = vrot.slane %v776, %v782
    %v784 = vcombine.high %v783, 0.0
    %v785 = vcombine.low %v233, %v235
    %v787 = vunpack.c.l.s4 1934713408
    %v788 = vunpack.c.0.s8 %v787
    %v789 = vlaneseq
    %v790 = vshrl.u32 %v789, 7
    %v791 = vsub.s32 %v788, %v790
    %v792 = vrot.slane %v785, %v791
    %v793 = vcombine.high %v792, 0.0
    %v794 = vcombine.low %v237, %v239
    %v796 = vunpack.c.l.s4 1934713408
    %v797 = vunpack.c.0.s8 %v796
    %v798 = vlaneseq
    %v799 = vshrl.u32 %v798, 7
    %v800 = vsub.s32 %v797, %v799
    %v801 = vrot.slane %v794, %v800
    %v802 = vcombine.high %v801, 0.0
    %v803 = vcombine.low %v241, %v243
    %v805 = vunpack.c.l.s4 1934713408
    %v806 = vunpack.c.0.s8 %v805
    %v807 = vlaneseq
    %v808 = vshrl.u32 %v807, 7
    %v809 = vsub.s32 %v806, %v808
    %v810 = vrot.slane %v803, %v809
    %v811 = vcombine.high %v810, 0.0
    %v812 = vcombine.low %v245, %v247
    %v814 = vunpack.c.l.s4 1934713408
    %v815 = vunpack.c.0.s8 %v814
    %v816 = vlaneseq
    %v817 = vshrl.u32 %v816, 7
    %v818 = vsub.s32 %v815, %v817
    %v819 = vrot.slane %v812, %v818
    %v820 = vcombine.high %v819, 0.0
    %v821 = vcombine.low %v249, %v251
    %v823 = vunpack.c.l.s4 1934713408
    %v824 = vunpack.c.0.s8 %v823
    %v825 = vlaneseq
    %v826 = vshrl.u32 %v825, 7
    %v827 = vsub.s32 %v824, %v826
    %v828 = vrot.slane %v821, %v827
    %v829 = vcombine.high %v828, 0.0
    %v830 = vcombine.low %v253, %v255
    %v832 = vunpack.c.l.s4 1934713408
    %v833 = vunpack.c.0.s8 %v832
    %v834 = vlaneseq
    %v835 = vshrl.u32 %v834, 7
    %v836 = vsub.s32 %v833, %v835
    %v837 = vrot.slane %v830, %v836
    %v838 = vcombine.high %v837, 0.0
    %v839 = vcombine.low %v257, %v259
    %v841 = vunpack.c.l.s4 1934713408
    %v842 = vunpack.c.0.s8 %v841
    %v843 = vlaneseq
    %v844 = vshrl.u32 %v843, 7
    %v845 = vsub.s32 %v842, %v844
    %v846 = vrot.slane %v839, %v845
    %v847 = vcombine.high %v846, 0.0
    %v848 = vcombine.low %v261, %v263
    %v850 = vunpack.c.l.s4 1934713408
    %v851 = vunpack.c.0.s8 %v850
    %v852 = vlaneseq
    %v853 = vshrl.u32 %v852, 7
    %v854 = vsub.s32 %v851, %v853
    %v855 = vrot.slane %v848, %v854
    %v856 = vcombine.high %v855, 0.0
    %v857 = vcombine.low %v265, %v267
    %v859 = vunpack.c.l.s4 1934713408
    %v860 = vunpack.c.0.s8 %v859
    %v861 = vlaneseq
    %v862 = vshrl.u32 %v861, 7
    %v863 = vsub.s32 %v860, %v862
    %v864 = vrot.slane %v857, %v863
    %v865 = vcombine.high %v864, 0.0
    %v866 = vcombine.low %v269, %v271
    %v868 = vunpack.c.l.s4 1934713408
    %v869 = vunpack.c.0.s8 %v868
    %v870 = vlaneseq
    %v871 = vshrl.u32 %v870, 7
    %v872 = vsub.s32 %v869, %v871
    %v873 = vrot.slane %v866, %v872
    %v874 = vcombine.high %v873, 0.0
    %v875 = vcombine.low %v273, %v275
    %v877 = vunpack.c.l.s4 1934713408
    %v878 = vunpack.c.0.s8 %v877
    %v879 = vlaneseq
    %v880 = vshrl.u32 %v879, 7
    %v881 = vsub.s32 %v878, %v880
    %v882 = vrot.slane %v875, %v881
    %v883 = vcombine.high %v882, 0.0
    %v1012 = vcombine.low %v315, %v324
    %v1013 = vcombine.low %v333, %v342
    %v1015 = vunpack.c.l.s4 1983009808
    %v1016 = vunpack.c.0.s8 %v1015
    %v1017 = vlaneseq
    %v1018 = vshrl.u32 %v1017, 7
    %v1019 = vsub.s32 %v1016, %v1018
    %v1020 = vrot.slane %v1012, %v1019
    %v1022 = vunpack.c.l.s4 1983009808
    %v1023 = vunpack.c.0.s8 %v1022
    %v1024 = vlaneseq
    %v1025 = vshrl.u32 %v1024, 7
    %v1026 = vsub.s32 %v1023, %v1025
    %v1027 = vrot.slane %v1013, %v1026
    %v1028 = vcombine.low %v1020, %v1027
    %v1029 = vcombine.low %v351, %v360
    %v1030 = vcombine.low %v369, %v378
    %v1032 = vunpack.c.l.s4 1983009808
    %v1033 = vunpack.c.0.s8 %v1032
    %v1034 = vlaneseq
    %v1035 = vshrl.u32 %v1034, 7
    %v1036 = vsub.s32 %v1033, %v1035
    %v1037 = vrot.slane %v1029, %v1036
    %v1039 = vunpack.c.l.s4 1983009808
    %v1040 = vunpack.c.0.s8 %v1039
    %v1041 = vlaneseq
    %v1042 = vshrl.u32 %v1041, 7
    %v1043 = vsub.s32 %v1040, %v1042
    %v1044 = vrot.slane %v1030, %v1043
    %v1045 = vcombine.low %v1037, %v1044
    %v1046 = vcombine.low %v387, %v396
    %v1047 = vcombine.low %v405, %v414
    %v1049 = vunpack.c.l.s4 1983009808
    %v1050 = vunpack.c.0.s8 %v1049
    %v1051 = vlaneseq
    %v1052 = vshrl.u32 %v1051, 7
    %v1053 = vsub.s32 %v1050, %v1052
    %v1054 = vrot.slane %v1046, %v1053
    %v1056 = vunpack.c.l.s4 1983009808
    %v1057 = vunpack.c.0.s8 %v1056
    %v1058 = vlaneseq
    %v1059 = vshrl.u32 %v1058, 7
    %v1060 = vsub.s32 %v1057, %v1059
    %v1061 = vrot.slane %v1047, %v1060
    %v1062 = vcombine.low %v1054, %v1061
    %v1063 = vcombine.low %v423, %v432
    %v1064 = vcombine.low %v441, %v450
    %v1066 = vunpack.c.l.s4 1983009808
    %v1067 = vunpack.c.0.s8 %v1066
    %v1068 = vlaneseq
    %v1069 = vshrl.u32 %v1068, 7
    %v1070 = vsub.s32 %v1067, %v1069
    %v1071 = vrot.slane %v1063, %v1070
    %v1073 = vunpack.c.l.s4 1983009808
    %v1074 = vunpack.c.0.s8 %v1073
    %v1075 = vlaneseq
    %v1076 = vshrl.u32 %v1075, 7
    %v1077 = vsub.s32 %v1074, %v1076
    %v1078 = vrot.slane %v1064, %v1077
    %v1079 = vcombine.low %v1071, %v1078
    %v1080 = vcombine.low %v459, %v468
    %v1081 = vcombine.low %v477, %v486
    %v1083 = vunpack.c.l.s4 1983009808
    %v1084 = vunpack.c.0.s8 %v1083
    %v1085 = vlaneseq
    %v1086 = vshrl.u32 %v1085, 7
    %v1087 = vsub.s32 %v1084, %v1086
    %v1088 = vrot.slane %v1080, %v1087
    %v1090 = vunpack.c.l.s4 1983009808
    %v1091 = vunpack.c.0.s8 %v1090
    %v1092 = vlaneseq
    %v1093 = vshrl.u32 %v1092, 7
    %v1094 = vsub.s32 %v1091, %v1093
    %v1095 = vrot.slane %v1081, %v1094
    %v1096 = vcombine.low %v1088, %v1095
    %v1097 = vcombine.low %v495, %v504
    %v1098 = vcombine.low %v513, %v522
    %v1100 = vunpack.c.l.s4 1983009808
    %v1101 = vunpack.c.0.s8 %v1100
    %v1102 = vlaneseq
    %v1103 = vshrl.u32 %v1102, 7
    %v1104 = vsub.s32 %v1101, %v1103
    %v1105 = vrot.slane %v1097, %v1104
    %v1107 = vunpack.c.l.s4 1983009808
    %v1108 = vunpack.c.0.s8 %v1107
    %v1109 = vlaneseq
    %v1110 = vshrl.u32 %v1109, 7
    %v1111 = vsub.s32 %v1108, %v1110
    %v1112 = vrot.slane %v1098, %v1111
    %v1113 = vcombine.low %v1105, %v1112
    %v1114 = vcombine.low %v531, %v540
    %v1115 = vcombine.low %v549, %v558
    %v1117 = vunpack.c.l.s4 1983009808
    %v1118 = vunpack.c.0.s8 %v1117
    %v1119 = vlaneseq
    %v1120 = vshrl.u32 %v1119, 7
    %v1121 = vsub.s32 %v1118, %v1120
    %v1122 = vrot.slane %v1114, %v1121
    %v1124 = vunpack.c.l.s4 1983009808
    %v1125 = vunpack.c.0.s8 %v1124
    %v1126 = vlaneseq
    %v1127 = vshrl.u32 %v1126, 7
    %v1128 = vsub.s32 %v1125, %v1127
    %v1129 = vrot.slane %v1115, %v1128
    %v1130 = vcombine.low %v1122, %v1129
    %v1131 = vcombine.low %v567, %v576
    %v1132 = vcombine.low %v585, %v594
    %v1134 = vunpack.c.l.s4 1983009808
    %v1135 = vunpack.c.0.s8 %v1134
    %v1136 = vlaneseq
    %v1137 = vshrl.u32 %v1136, 7
    %v1138 = vsub.s32 %v1135, %v1137
    %v1139 = vrot.slane %v1131, %v1138
    %v1141 = vunpack.c.l.s4 1983009808
    %v1142 = vunpack.c.0.s8 %v1141
    %v1143 = vlaneseq
    %v1144 = vshrl.u32 %v1143, 7
    %v1145 = vsub.s32 %v1142, %v1144
    %v1146 = vrot.slane %v1132, %v1145
    %v1147 = vcombine.low %v1139, %v1146
    %v1148 = vcombine.low %v603, %v612
    %v1149 = vcombine.low %v621, %v630
    %v1151 = vunpack.c.l.s4 1983009808
    %v1152 = vunpack.c.0.s8 %v1151
    %v1153 = vlaneseq
    %v1154 = vshrl.u32 %v1153, 7
    %v1155 = vsub.s32 %v1152, %v1154
    %v1156 = vrot.slane %v1148, %v1155
    %v1158 = vunpack.c.l.s4 1983009808
    %v1159 = vunpack.c.0.s8 %v1158
    %v1160 = vlaneseq
    %v1161 = vshrl.u32 %v1160, 7
    %v1162 = vsub.s32 %v1159, %v1161
    %v1163 = vrot.slane %v1149, %v1162
    %v1164 = vcombine.low %v1156, %v1163
    %v1165 = vcombine.low %v639, %v648
    %v1166 = vcombine.low %v657, %v666
    %v1168 = vunpack.c.l.s4 1983009808
    %v1169 = vunpack.c.0.s8 %v1168
    %v1170 = vlaneseq
    %v1171 = vshrl.u32 %v1170, 7
    %v1172 = vsub.s32 %v1169, %v1171
    %v1173 = vrot.slane %v1165, %v1172
    %v1175 = vunpack.c.l.s4 1983009808
    %v1176 = vunpack.c.0.s8 %v1175
    %v1177 = vlaneseq
    %v1178 = vshrl.u32 %v1177, 7
    %v1179 = vsub.s32 %v1176, %v1178
    %v1180 = vrot.slane %v1166, %v1179
    %v1181 = vcombine.low %v1173, %v1180
    %v1182 = vcombine.low %v675, %v684
    %v1183 = vcombine.low %v693, %v702
    %v1185 = vunpack.c.l.s4 1983009808
    %v1186 = vunpack.c.0.s8 %v1185
    %v1187 = vlaneseq
    %v1188 = vshrl.u32 %v1187, 7
    %v1189 = vsub.s32 %v1186, %v1188
    %v1190 = vrot.slane %v1182, %v1189
    %v1192 = vunpack.c.l.s4 1983009808
    %v1193 = vunpack.c.0.s8 %v1192
    %v1194 = vlaneseq
    %v1195 = vshrl.u32 %v1194, 7
    %v1196 = vsub.s32 %v1193, %v1195
    %v1197 = vrot.slane %v1183, %v1196
    %v1198 = vcombine.low %v1190, %v1197
    %v1199 = vcombine.low %v711, %v720
    %v1200 = vcombine.low %v729, %v738
    %v1202 = vunpack.c.l.s4 1983009808
    %v1203 = vunpack.c.0.s8 %v1202
    %v1204 = vlaneseq
    %v1205 = vshrl.u32 %v1204, 7
    %v1206 = vsub.s32 %v1203, %v1205
    %v1207 = vrot.slane %v1199, %v1206
    %v1209 = vunpack.c.l.s4 1983009808
    %v1210 = vunpack.c.0.s8 %v1209
    %v1211 = vlaneseq
    %v1212 = vshrl.u32 %v1211, 7
    %v1213 = vsub.s32 %v1210, %v1212
    %v1214 = vrot.slane %v1200, %v1213
    %v1215 = vcombine.low %v1207, %v1214
    %v1216 = vcombine.low %v747, %v756
    %v1217 = vcombine.low %v765, %v774
    %v1219 = vunpack.c.l.s4 1983009808
    %v1220 = vunpack.c.0.s8 %v1219
    %v1221 = vlaneseq
    %v1222 = vshrl.u32 %v1221, 7
    %v1223 = vsub.s32 %v1220, %v1222
    %v1224 = vrot.slane %v1216, %v1223
    %v1226 = vunpack.c.l.s4 1983009808
    %v1227 = vunpack.c.0.s8 %v1226
    %v1228 = vlaneseq
    %v1229 = vshrl.u32 %v1228, 7
    %v1230 = vsub.s32 %v1227, %v1229
    %v1231 = vrot.slane %v1217, %v1230
    %v1232 = vcombine.low %v1224, %v1231
    %v1233 = vcombine.low %v783, %v792
    %v1234 = vcombine.low %v801, %v810
    %v1236 = vunpack.c.l.s4 1983009808
    %v1237 = vunpack.c.0.s8 %v1236
    %v1238 = vlaneseq
    %v1239 = vshrl.u32 %v1238, 7
    %v1240 = vsub.s32 %v1237, %v1239
    %v1241 = vrot.slane %v1233, %v1240
    %v1243 = vunpack.c.l.s4 1983009808
    %v1244 = vunpack.c.0.s8 %v1243
    %v1245 = vlaneseq
    %v1246 = vshrl.u32 %v1245, 7
    %v1247 = vsub.s32 %v1244, %v1246
    %v1248 = vrot.slane %v1234, %v1247
    %v1249 = vcombine.low %v1241, %v1248
    %v1250 = vcombine.low %v819, %v828
    %v1251 = vcombine.low %v837, %v846
    %v1253 = vunpack.c.l.s4 1983009808
    %v1254 = vunpack.c.0.s8 %v1253
    %v1255 = vlaneseq
    %v1256 = vshrl.u32 %v1255, 7
    %v1257 = vsub.s32 %v1254, %v1256
    %v1258 = vrot.slane %v1250, %v1257
    %v1260 = vunpack.c.l.s4 1983009808
    %v1261 = vunpack.c.0.s8 %v1260
    %v1262 = vlaneseq
    %v1263 = vshrl.u32 %v1262, 7
    %v1264 = vsub.s32 %v1261, %v1263
    %v1265 = vrot.slane %v1251, %v1264
    %v1266 = vcombine.low %v1258, %v1265
    %v1267 = vcombine.low %v855, %v864
    %v1268 = vcombine.low %v873, %v882
    %v1270 = vunpack.c.l.s4 1983009808
    %v1271 = vunpack.c.0.s8 %v1270
    %v1272 = vlaneseq
    %v1273 = vshrl.u32 %v1272, 7
    %v1274 = vsub.s32 %v1271, %v1273
    %v1275 = vrot.slane %v1267, %v1274
    %v1277 = vunpack.c.l.s4 1983009808
    %v1278 = vunpack.c.0.s8 %v1277
    %v1279 = vlaneseq
    %v1280 = vshrl.u32 %v1279, 7
    %v1281 = vsub.s32 %v1278, %v1280
    %v1282 = vrot.slane %v1268, %v1281
    %v1283 = vcombine.low %v1275, %v1282
    %v1284 = vcombine.low %v316, %v325
    %v1285 = vcombine.low %v334, %v343
    %v1287 = vunpack.c.l.s4 1983009808
    %v1288 = vunpack.c.0.s8 %v1287
    %v1289 = vlaneseq
    %v1290 = vshrl.u32 %v1289, 7
    %v1291 = vsub.s32 %v1288, %v1290
    %v1292 = vrot.slane %v1284, %v1291
    %v1294 = vunpack.c.l.s4 1983009808
    %v1295 = vunpack.c.0.s8 %v1294
    %v1296 = vlaneseq
    %v1297 = vshrl.u32 %v1296, 7
    %v1298 = vsub.s32 %v1295, %v1297
    %v1299 = vrot.slane %v1285, %v1298
    %v1300 = vcombine.low %v1292, %v1299
    %v1301 = vcombine.low %v352, %v361
    %v1302 = vcombine.low %v370, %v379
    %v1304 = vunpack.c.l.s4 1983009808
    %v1305 = vunpack.c.0.s8 %v1304
    %v1306 = vlaneseq
    %v1307 = vshrl.u32 %v1306, 7
    %v1308 = vsub.s32 %v1305, %v1307
    %v1309 = vrot.slane %v1301, %v1308
    %v1311 = vunpack.c.l.s4 1983009808
    %v1312 = vunpack.c.0.s8 %v1311
    %v1313 = vlaneseq
    %v1314 = vshrl.u32 %v1313, 7
    %v1315 = vsub.s32 %v1312, %v1314
    %v1316 = vrot.slane %v1302, %v1315
    %v1317 = vcombine.low %v1309, %v1316
    %v1318 = vcombine.low %v388, %v397
    %v1319 = vcombine.low %v406, %v415
    %v1321 = vunpack.c.l.s4 1983009808
    %v1322 = vunpack.c.0.s8 %v1321
    %v1323 = vlaneseq
    %v1324 = vshrl.u32 %v1323, 7
    %v1325 = vsub.s32 %v1322, %v1324
    %v1326 = vrot.slane %v1318, %v1325
    %v1328 = vunpack.c.l.s4 1983009808
    %v1329 = vunpack.c.0.s8 %v1328
    %v1330 = vlaneseq
    %v1331 = vshrl.u32 %v1330, 7
    %v1332 = vsub.s32 %v1329, %v1331
    %v1333 = vrot.slane %v1319, %v1332
    %v1334 = vcombine.low %v1326, %v1333
    %v1335 = vcombine.low %v424, %v433
    %v1336 = vcombine.low %v442, %v451
    %v1338 = vunpack.c.l.s4 1983009808
    %v1339 = vunpack.c.0.s8 %v1338
    %v1340 = vlaneseq
    %v1341 = vshrl.u32 %v1340, 7
    %v1342 = vsub.s32 %v1339, %v1341
    %v1343 = vrot.slane %v1335, %v1342
    %v1345 = vunpack.c.l.s4 1983009808
    %v1346 = vunpack.c.0.s8 %v1345
    %v1347 = vlaneseq
    %v1348 = vshrl.u32 %v1347, 7
    %v1349 = vsub.s32 %v1346, %v1348
    %v1350 = vrot.slane %v1336, %v1349
    %v1351 = vcombine.low %v1343, %v1350
    %v1352 = vcombine.low %v460, %v469
    %v1353 = vcombine.low %v478, %v487
    %v1355 = vunpack.c.l.s4 1983009808
    %v1356 = vunpack.c.0.s8 %v1355
    %v1357 = vlaneseq
    %v1358 = vshrl.u32 %v1357, 7
    %v1359 = vsub.s32 %v1356, %v1358
    %v1360 = vrot.slane %v1352, %v1359
    %v1362 = vunpack.c.l.s4 1983009808
    %v1363 = vunpack.c.0.s8 %v1362
    %v1364 = vlaneseq
    %v1365 = vshrl.u32 %v1364, 7
    %v1366 = vsub.s32 %v1363, %v1365
    %v1367 = vrot.slane %v1353, %v1366
    %v1368 = vcombine.low %v1360, %v1367
    %v1369 = vcombine.low %v496, %v505
    %v1370 = vcombine.low %v514, %v523
    %v1372 = vunpack.c.l.s4 1983009808
    %v1373 = vunpack.c.0.s8 %v1372
    %v1374 = vlaneseq
    %v1375 = vshrl.u32 %v1374, 7
    %v1376 = vsub.s32 %v1373, %v1375
    %v1377 = vrot.slane %v1369, %v1376
    %v1379 = vunpack.c.l.s4 1983009808
    %v1380 = vunpack.c.0.s8 %v1379
    %v1381 = vlaneseq
    %v1382 = vshrl.u32 %v1381, 7
    %v1383 = vsub.s32 %v1380, %v1382
    %v1384 = vrot.slane %v1370, %v1383
    %v1385 = vcombine.low %v1377, %v1384
    %v1386 = vcombine.low %v532, %v541
    %v1387 = vcombine.low %v550, %v559
    %v1389 = vunpack.c.l.s4 1983009808
    %v1390 = vunpack.c.0.s8 %v1389
    %v1391 = vlaneseq
    %v1392 = vshrl.u32 %v1391, 7
    %v1393 = vsub.s32 %v1390, %v1392
    %v1394 = vrot.slane %v1386, %v1393
    %v1396 = vunpack.c.l.s4 1983009808
    %v1397 = vunpack.c.0.s8 %v1396
    %v1398 = vlaneseq
    %v1399 = vshrl.u32 %v1398, 7
    %v1400 = vsub.s32 %v1397, %v1399
    %v1401 = vrot.slane %v1387, %v1400
    %v1402 = vcombine.low %v1394, %v1401
    %v1403 = vcombine.low %v568, %v577
    %v1404 = vcombine.low %v586, %v595
    %v1406 = vunpack.c.l.s4 1983009808
    %v1407 = vunpack.c.0.s8 %v1406
    %v1408 = vlaneseq
    %v1409 = vshrl.u32 %v1408, 7
    %v1410 = vsub.s32 %v1407, %v1409
    %v1411 = vrot.slane %v1403, %v1410
    %v1413 = vunpack.c.l.s4 1983009808
    %v1414 = vunpack.c.0.s8 %v1413
    %v1415 = vlaneseq
    %v1416 = vshrl.u32 %v1415, 7
    %v1417 = vsub.s32 %v1414, %v1416
    %v1418 = vrot.slane %v1404, %v1417
    %v1419 = vcombine.low %v1411, %v1418
    %v1420 = vcombine.low %v604, %v613
    %v1421 = vcombine.low %v622, %v631
    %v1423 = vunpack.c.l.s4 1983009808
    %v1424 = vunpack.c.0.s8 %v1423
    %v1425 = vlaneseq
    %v1426 = vshrl.u32 %v1425, 7
    %v1427 = vsub.s32 %v1424, %v1426
    %v1428 = vrot.slane %v1420, %v1427
    %v1430 = vunpack.c.l.s4 1983009808
    %v1431 = vunpack.c.0.s8 %v1430
    %v1432 = vlaneseq
    %v1433 = vshrl.u32 %v1432, 7
    %v1434 = vsub.s32 %v1431, %v1433
    %v1435 = vrot.slane %v1421, %v1434
    %v1436 = vcombine.low %v1428, %v1435
    %v1437 = vcombine.low %v640, %v649
    %v1438 = vcombine.low %v658, %v667
    %v1440 = vunpack.c.l.s4 1983009808
    %v1441 = vunpack.c.0.s8 %v1440
    %v1442 = vlaneseq
    %v1443 = vshrl.u32 %v1442, 7
    %v1444 = vsub.s32 %v1441, %v1443
    %v1445 = vrot.slane %v1437, %v1444
    %v1447 = vunpack.c.l.s4 1983009808
    %v1448 = vunpack.c.0.s8 %v1447
    %v1449 = vlaneseq
    %v1450 = vshrl.u32 %v1449, 7
    %v1451 = vsub.s32 %v1448, %v1450
    %v1452 = vrot.slane %v1438, %v1451
    %v1453 = vcombine.low %v1445, %v1452
    %v1454 = vcombine.low %v676, %v685
    %v1455 = vcombine.low %v694, %v703
    %v1457 = vunpack.c.l.s4 1983009808
    %v1458 = vunpack.c.0.s8 %v1457
    %v1459 = vlaneseq
    %v1460 = vshrl.u32 %v1459, 7
    %v1461 = vsub.s32 %v1458, %v1460
    %v1462 = vrot.slane %v1454, %v1461
    %v1464 = vunpack.c.l.s4 1983009808
    %v1465 = vunpack.c.0.s8 %v1464
    %v1466 = vlaneseq
    %v1467 = vshrl.u32 %v1466, 7
    %v1468 = vsub.s32 %v1465, %v1467
    %v1469 = vrot.slane %v1455, %v1468
    %v1470 = vcombine.low %v1462, %v1469
    %v1471 = vcombine.low %v712, %v721
    %v1472 = vcombine.low %v730, %v739
    %v1474 = vunpack.c.l.s4 1983009808
    %v1475 = vunpack.c.0.s8 %v1474
    %v1476 = vlaneseq
    %v1477 = vshrl.u32 %v1476, 7
    %v1478 = vsub.s32 %v1475, %v1477
    %v1479 = vrot.slane %v1471, %v1478
    %v1481 = vunpack.c.l.s4 1983009808
    %v1482 = vunpack.c.0.s8 %v1481
    %v1483 = vlaneseq
    %v1484 = vshrl.u32 %v1483, 7
    %v1485 = vsub.s32 %v1482, %v1484
    %v1486 = vrot.slane %v1472, %v1485
    %v1487 = vcombine.low %v1479, %v1486
    %v1488 = vcombine.low %v748, %v757
    %v1489 = vcombine.low %v766, %v775
    %v1491 = vunpack.c.l.s4 1983009808
    %v1492 = vunpack.c.0.s8 %v1491
    %v1493 = vlaneseq
    %v1494 = vshrl.u32 %v1493, 7
    %v1495 = vsub.s32 %v1492, %v1494
    %v1496 = vrot.slane %v1488, %v1495
    %v1498 = vunpack.c.l.s4 1983009808
    %v1499 = vunpack.c.0.s8 %v1498
    %v1500 = vlaneseq
    %v1501 = vshrl.u32 %v1500, 7
    %v1502 = vsub.s32 %v1499, %v1501
    %v1503 = vrot.slane %v1489, %v1502
    %v1504 = vcombine.low %v1496, %v1503
    %v1505 = vcombine.low %v784, %v793
    %v1506 = vcombine.low %v802, %v811
    %v1508 = vunpack.c.l.s4 1983009808
    %v1509 = vunpack.c.0.s8 %v1508
    %v1510 = vlaneseq
    %v1511 = vshrl.u32 %v1510, 7
    %v1512 = vsub.s32 %v1509, %v1511
    %v1513 = vrot.slane %v1505, %v1512
    %v1515 = vunpack.c.l.s4 1983009808
    %v1516 = vunpack.c.0.s8 %v1515
    %v1517 = vlaneseq
    %v1518 = vshrl.u32 %v1517, 7
    %v1519 = vsub.s32 %v1516, %v1518
    %v1520 = vrot.slane %v1506, %v1519
    %v1521 = vcombine.low %v1513, %v1520
    %v1522 = vcombine.low %v820, %v829
    %v1523 = vcombine.low %v838, %v847
    %v1525 = vunpack.c.l.s4 1983009808
    %v1526 = vunpack.c.0.s8 %v1525
    %v1527 = vlaneseq
    %v1528 = vshrl.u32 %v1527, 7
    %v1529 = vsub.s32 %v1526, %v1528
    %v1530 = vrot.slane %v1522, %v1529
    %v1532 = vunpack.c.l.s4 1983009808
    %v1533 = vunpack.c.0.s8 %v1532
    %v1534 = vlaneseq
    %v1535 = vshrl.u32 %v1534, 7
    %v1536 = vsub.s32 %v1533, %v1535
    %v1537 = vrot.slane %v1523, %v1536
    %v1538 = vcombine.low %v1530, %v1537
    %v1539 = vcombine.low %v856, %v865
    %v1540 = vcombine.low %v874, %v883
    %v1542 = vunpack.c.l.s4 1983009808
    %v1543 = vunpack.c.0.s8 %v1542
    %v1544 = vlaneseq
    %v1545 = vshrl.u32 %v1544, 7
    %v1546 = vsub.s32 %v1543, %v1545
    %v1547 = vrot.slane %v1539, %v1546
    %v1549 = vunpack.c.l.s4 1983009808
    %v1550 = vunpack.c.0.s8 %v1549
    %v1551 = vlaneseq
    %v1552 = vshrl.u32 %v1551, 7
    %v1553 = vsub.s32 %v1550, %v1552
    %v1554 = vrot.slane %v1540, %v1553
    %v1555 = vcombine.low %v1547, %v1554
    %1556 = vset.pattern.permute.xlu0 0
    %1557 = vperm.xlu0 %1556, %v1028
    %v1558 = vpop.permute.xlu0 %1557
    %1559 = vset.pattern.permute.xlu0 0
    %1560 = vperm.xlu0 %1559, %v1045
    %v1561 = vpop.permute.xlu0 %1560
    %1562 = vset.pattern.permute.xlu0 0
    %1563 = vperm.xlu0 %1562, %v1062
    %v1564 = vpop.permute.xlu0 %1563
    %1565 = vset.pattern.permute.xlu0 0
    %1566 = vperm.xlu0 %1565, %v1079
    %v1567 = vpop.permute.xlu0 %1566
    %1568 = vset.pattern.permute.xlu0 0
    %1569 = vperm.xlu0 %1568, %v1096
    %v1570 = vpop.permute.xlu0 %1569
    %1571 = vset.pattern.permute.xlu0 0
    %1572 = vperm.xlu0 %1571, %v1113
    %v1573 = vpop.permute.xlu0 %1572
    %1574 = vset.pattern.permute.xlu0 0
    %1575 = vperm.xlu0 %1574, %v1130
    %v1576 = vpop.permute.xlu0 %1575
    %1577 = vset.pattern.permute.xlu0 0
    %1578 = vperm.xlu0 %1577, %v1147
    %v1579 = vpop.permute.xlu0 %1578
    %1580 = vset.pattern.permute.xlu0 0
    %1581 = vperm.xlu0 %1580, %v1164
    %v1582 = vpop.permute.xlu0 %1581
    %1583 = vset.pattern.permute.xlu0 0
    %1584 = vperm.xlu0 %1583, %v1181
    %v1585 = vpop.permute.xlu0 %1584
    %1586 = vset.pattern.permute.xlu0 0
    %1587 = vperm.xlu0 %1586, %v1198
    %v1588 = vpop.permute.xlu0 %1587
    %1589 = vset.pattern.permute.xlu0 0
    %1590 = vperm.xlu0 %1589, %v1215
    %v1591 = vpop.permute.xlu0 %1590
    %1592 = vset.pattern.permute.xlu0 0
    %1593 = vperm.xlu0 %1592, %v1232
    %v1594 = vpop.permute.xlu0 %1593
    %1595 = vset.pattern.permute.xlu0 0
    %1596 = vperm.xlu0 %1595, %v1249
    %v1597 = vpop.permute.xlu0 %1596
    %1598 = vset.pattern.permute.xlu0 0
    %1599 = vperm.xlu0 %1598, %v1266
    %v1600 = vpop.permute.xlu0 %1599
    %1601 = vset.pattern.permute.xlu0 0
    %1602 = vperm.xlu0 %1601, %v1283
    %v1603 = vpop.permute.xlu0 %1602
    %1604 = vset.pattern.permute.xlu0 0
    %1605 = vperm.xlu0 %1604, %v1300
    %v1606 = vpop.permute.xlu0 %1605
    %1607 = vset.pattern.permute.xlu0 0
    %1608 = vperm.xlu0 %1607, %v1317
    %v1609 = vpop.permute.xlu0 %1608
    %1610 = vset.pattern.permute.xlu0 0
    %1611 = vperm.xlu0 %1610, %v1334
    %v1612 = vpop.permute.xlu0 %1611
    %1613 = vset.pattern.permute.xlu0 0
    %1614 = vperm.xlu0 %1613, %v1351
    %v1615 = vpop.permute.xlu0 %1614
    %1616 = vset.pattern.permute.xlu0 0
    %1617 = vperm.xlu0 %1616, %v1368
    %v1618 = vpop.permute.xlu0 %1617
    %1619 = vset.pattern.permute.xlu0 0
    %1620 = vperm.xlu0 %1619, %v1385
    %v1621 = vpop.permute.xlu0 %1620
    %1622 = vset.pattern.permute.xlu0 0
    %1623 = vperm.xlu0 %1622, %v1402
    %v1624 = vpop.permute.xlu0 %1623
    %1625 = vset.pattern.permute.xlu0 0
    %1626 = vperm.xlu0 %1625, %v1419
    %v1627 = vpop.permute.xlu0 %1626
    %1628 = vset.pattern.permute.xlu0 0
    %1629 = vperm.xlu0 %1628, %v1436
    %v1630 = vpop.permute.xlu0 %1629
    %1631 = vset.pattern.permute.xlu0 0
    %1632 = vperm.xlu0 %1631, %v1453
    %v1633 = vpop.permute.xlu0 %1632
    %1634 = vset.pattern.permute.xlu0 0
    %1635 = vperm.xlu0 %1634, %v1470
    %v1636 = vpop.permute.xlu0 %1635
    %1637 = vset.pattern.permute.xlu0 0
    %1638 = vperm.xlu0 %1637, %v1487
    %v1639 = vpop.permute.xlu0 %1638
    %1640 = vset.pattern.permute.xlu0 0
    %1641 = vperm.xlu0 %1640, %v1504
    %v1642 = vpop.permute.xlu0 %1641
    %1643 = vset.pattern.permute.xlu0 0
    %1644 = vperm.xlu0 %1643, %v1521
    %v1645 = vpop.permute.xlu0 %1644
    %1646 = vset.pattern.permute.xlu0 0
    %1647 = vperm.xlu0 %1646, %v1538
    %v1648 = vpop.permute.xlu0 %1647
    %1649 = vset.pattern.permute.xlu0 0
    %1650 = vperm.xlu0 %1649, %v1555
    %v1651 = vpop.permute.xlu0 %1650
    %v1652 = vlaneseq
    %v1653 = vand.u32 %v1652, 127
    %v1654 = vlaneseq
    %v1655 = vshrl.u32 %v1654, 7
    %v1656 = vsub.s32 %v1653, %v1655
    %v1657 = vrot.slane %v1558, %v1656
    %v1658 = vadd.s32 %v1653, 4294967288
    %v1659 = vlaneseq
    %v1660 = vshrl.u32 %v1659, 7
    %v1661 = vsub.s32 %v1658, %v1660
    %v1662 = vrot.slane %v1561, %v1661
    %vm1663 = vcmask 130112
    %v1664 = vsel %vm1663, %v1662, %v1657
    %v1665 = vadd.s32 %v1653, 4294967280
    %v1666 = vlaneseq
    %v1667 = vshrl.u32 %v1666, 7
    %v1668 = vsub.s32 %v1665, %v1667
    %v1669 = vrot.slane %v1564, %v1668
    %vm1670 = vcmask 195712
    %v1671 = vsel %vm1670, %v1669, %v1664
    %v1672 = vadd.s32 %v1653, 4294967272
    %v1673 = vlaneseq
    %v1674 = vshrl.u32 %v1673, 7
    %v1675 = vsub.s32 %v1672, %v1674
    %v1676 = vrot.slane %v1567, %v1675
    %vm1677 = vcmask 261312
    %v1678 = vsel %vm1677, %v1676, %v1671
    %v1679 = vadd.s32 %v1653, 4294967264
    %v1680 = vlaneseq
    %v1681 = vshrl.u32 %v1680, 7
    %v1682 = vsub.s32 %v1679, %v1681
    %v1683 = vrot.slane %v1570, %v1682
    %vm1684 = vcmask 326912
    %v1685 = vsel %vm1684, %v1683, %v1678
    %v1686 = vadd.s32 %v1653, 4294967256
    %v1687 = vlaneseq
    %v1688 = vshrl.u32 %v1687, 7
    %v1689 = vsub.s32 %v1686, %v1688
    %v1690 = vrot.slane %v1573, %v1689
    %vm1691 = vcmask 392512
    %v1692 = vsel %vm1691, %v1690, %v1685
    %v1693 = vadd.s32 %v1653, 4294967248
    %v1694 = vlaneseq
    %v1695 = vshrl.u32 %v1694, 7
    %v1696 = vsub.s32 %v1693, %v1695
    %v1697 = vrot.slane %v1576, %v1696
    %vm1698 = vcmask 458112
    %v1699 = vsel %vm1698, %v1697, %v1692
    %v1700 = vadd.s32 %v1653, 4294967240
    %v1701 = vlaneseq
    %v1702 = vshrl.u32 %v1701, 7
    %v1703 = vsub.s32 %v1700, %v1702
    %v1704 = vrot.slane %v1579, %v1703
    %vm1705 = vcmask 523712
    %v1706 = vsel %vm1705, %v1704, %v1699
    %v1707 = vadd.s32 %v1653, 4294967232
    %v1708 = vlaneseq
    %v1709 = vshrl.u32 %v1708, 7
    %v1710 = vsub.s32 %v1707, %v1709
    %v1711 = vrot.slane %v1582, %v1710
    %vm1712 = vcmask 589312
    %v1713 = vsel %vm1712, %v1711, %v1706
    %v1714 = vadd.s32 %v1653, 4294967224
    %v1715 = vlaneseq
    %v1716 = vshrl.u32 %v1715, 7
    %v1717 = vsub.s32 %v1714, %v1716
    %v1718 = vrot.slane %v1585, %v1717
    %vm1719 = vcmask 654912
    %v1720 = vsel %vm1719, %v1718, %v1713
    %v1721 = vadd.s32 %v1653, 4294967216
    %v1722 = vlaneseq
    %v1723 = vshrl.u32 %v1722, 7
    %v1724 = vsub.s32 %v1721, %v1723
    %v1725 = vrot.slane %v1588, %v1724
    %vm1726 = vcmask 720512
    %v1727 = vsel %vm1726, %v1725, %v1720
    %v1728 = vadd.s32 %v1653, 4294967208
    %v1729 = vlaneseq
    %v1730 = vshrl.u32 %v1729, 7
    %v1731 = vsub.s32 %v1728, %v1730
    %v1732 = vrot.slane %v1591, %v1731
    %vm1733 = vcmask 786112
    %v1734 = vsel %vm1733, %v1732, %v1727
    %v1735 = vadd.s32 %v1653, 4294967200
    %v1736 = vlaneseq
    %v1737 = vshrl.u32 %v1736, 7
    %v1738 = vsub.s32 %v1735, %v1737
    %v1739 = vrot.slane %v1594, %v1738
    %vm1740 = vcmask 851712
    %v1741 = vsel %vm1740, %v1739, %v1734
    %v1742 = vadd.s32 %v1653, 4294967192
    %v1743 = vlaneseq
    %v1744 = vshrl.u32 %v1743, 7
    %v1745 = vsub.s32 %v1742, %v1744
    %v1746 = vrot.slane %v1597, %v1745
    %vm1747 = vcmask 917312
    %v1748 = vsel %vm1747, %v1746, %v1741
    %v1749 = vadd.s32 %v1653, 4294967184
    %v1750 = vlaneseq
    %v1751 = vshrl.u32 %v1750, 7
    %v1752 = vsub.s32 %v1749, %v1751
    %v1753 = vrot.slane %v1600, %v1752
    %vm1754 = vcmask 982912
    %v1755 = vsel %vm1754, %v1753, %v1748
    %v1756 = vadd.s32 %v1653, 4294967176
    %v1757 = vlaneseq
    %v1758 = vshrl.u32 %v1757, 7
    %v1759 = vsub.s32 %v1756, %v1758
    %v1760 = vrot.slane %v1603, %v1759
    %vm1761 = vcmask 1048512
    %v1762 = vsel %vm1761, %v1760, %v1755
    %v1763 = vlaneseq
    %v1764 = vshrl.u32 %v1763, 7
    %v1765 = vsub.s32 %v1653, %v1764
    %v1766 = vrot.slane %v1606, %v1765
    %v1767 = vlaneseq
    %v1768 = vshrl.u32 %v1767, 7
    %v1769 = vsub.s32 %v1658, %v1768
    %v1770 = vrot.slane %v1609, %v1769
    %v1771 = vsel %vm1663, %v1770, %v1766
    %v1772 = vlaneseq
    %v1773 = vshrl.u32 %v1772, 7
    %v1774 = vsub.s32 %v1665, %v1773
    %v1775 = vrot.slane %v1612, %v1774
    %v1776 = vsel %vm1670, %v1775, %v1771
    %v1777 = vlaneseq
    %v1778 = vshrl.u32 %v1777, 7
    %v1779 = vsub.s32 %v1672, %v1778
    %v1780 = vrot.slane %v1615, %v1779
    %v1781 = vsel %vm1677, %v1780, %v1776
    %v1782 = vlaneseq
    %v1783 = vshrl.u32 %v1782, 7
    %v1784 = vsub.s32 %v1679, %v1783
    %v1785 = vrot.slane %v1618, %v1784
    %v1786 = vsel %vm1684, %v1785, %v1781
    %v1787 = vlaneseq
    %v1788 = vshrl.u32 %v1787, 7
    %v1789 = vsub.s32 %v1686, %v1788
    %v1790 = vrot.slane %v1621, %v1789
    %v1791 = vsel %vm1691, %v1790, %v1786
    %v1792 = vlaneseq
    %v1793 = vshrl.u32 %v1792, 7
    %v1794 = vsub.s32 %v1693, %v1793
    %v1795 = vrot.slane %v1624, %v1794
    %v1796 = vsel %vm1698, %v1795, %v1791
    %v1797 = vlaneseq
    %v1798 = vshrl.u32 %v1797, 7
    %v1799 = vsub.s32 %v1700, %v1798
    %v1800 = vrot.slane %v1627, %v1799
    %v1801 = vsel %vm1705, %v1800, %v1796
    %v1802 = vlaneseq
    %v1803 = vshrl.u32 %v1802, 7
    %v1804 = vsub.s32 %v1707, %v1803
    %v1805 = vrot.slane %v1630, %v1804
    %v1806 = vsel %vm1712, %v1805, %v1801
    %v1807 = vlaneseq
    %v1808 = vshrl.u32 %v1807, 7
    %v1809 = vsub.s32 %v1714, %v1808
    %v1810 = vrot.slane %v1633, %v1809
    %v1811 = vsel %vm1719, %v1810, %v1806
    %v1812 = vlaneseq
    %v1813 = vshrl.u32 %v1812, 7
    %v1814 = vsub.s32 %v1721, %v1813
    %v1815 = vrot.slane %v1636, %v1814
    %v1816 = vsel %vm1726, %v1815, %v1811
    %v1817 = vlaneseq
    %v1818 = vshrl.u32 %v1817, 7
    %v1819 = vsub.s32 %v1728, %v1818
    %v1820 = vrot.slane %v1639, %v1819
    %v1821 = vsel %vm1733, %v1820, %v1816
    %v1822 = vlaneseq
    %v1823 = vshrl.u32 %v1822, 7
    %v1824 = vsub.s32 %v1735, %v1823
    %v1825 = vrot.slane %v1642, %v1824
    %v1826 = vsel %vm1740, %v1825, %v1821
    %v1827 = vlaneseq
    %v1828 = vshrl.u32 %v1827, 7
    %v1829 = vsub.s32 %v1742, %v1828
    %v1830 = vrot.slane %v1645, %v1829
    %v1831 = vsel %vm1747, %v1830, %v1826
    %v1832 = vlaneseq
    %v1833 = vshrl.u32 %v1832, 7
    %v1834 = vsub.s32 %v1749, %v1833
    %v1835 = vrot.slane %v1648, %v1834
    %v1836 = vsel %vm1754, %v1835, %v1831
    %v1837 = vlaneseq
    %v1838 = vshrl.u32 %v1837, 7
    %v1839 = vsub.s32 %v1756, %v1838
    %v1840 = vrot.slane %v1651, %v1839
    %v1841 = vsel %vm1761, %v1840, %v1836
    %vm1842 = vcmask 1041409
    %v1843 = vsel %vm1842, %v1841, %v1762
    %1845 = vst [vmem:[#allocation5] sm:$0x3] %v1843
    // Predicated region
    $region10: #{tpu_custom_call.1} parent=1 // pred_check
      _
    $region11: #{tpu_custom_call.1} parent=1 // pred_check_branch
      %1847 = sbr.rel (0) target = $region13
    $region12: #{tpu_custom_call.1} parent=1 // pred_region
      %s1849 = ssub.s32 32, 32
      %1850 = vsyncadd [#allocation4], %s1849
      %s1852 = sshll.u32 [#allocation5], 4
      %s1853 = int_to_ptr.vmem [resolvable:$true] %s1852
      %1855 = dma.vmem_to_hbm [thread:$0]  %s1853, 32, %s1, [#allocation4]
    $region13: #{tpu_custom_call.1} parent=1 // pred_fallthru
      _
    // Predicated region
    $region14: #{tpu_custom_call.1} parent=1 // pred_check
      _
    $region15: #{tpu_custom_call.1} parent=1 // pred_check_branch
      %1857 = sbr.rel (0) target = $region17
    $region16: #{tpu_custom_call.1} parent=1 // pred_region
      %1858 = dma.done [#allocation4], 32
    $region17: #{tpu_custom_call.1} parent=1 // pred_fallthru
      _
    %1859 = vsyncpa [#allocation3], 1
    %1860 = vsyncpa [#allocation4], 1

</llo_original>
